<compile_context>
chip_gen: v7x
topology: tpu7x:2x2x1
jax: 0.10.0
libtpu: 0.0.40
codegen_flags: <defaults>
</compile_context>

<pallas_src>
import jax
import jax.numpy as jnp
from jax.experimental import pallas as pl
from jax.experimental.pallas import tpu as pltpu


def _round_up(x, m):
    return (x + m - 1) // m * m


def tcn_kernel(xcol_ref, w_ref, p_ref, o_ref):
    # xcol_ref: (K*Cin, TILE_M)   im2col'd input slab (lane axis = M)
    # w_ref   : (3*Cout, K*Cin)   stacked conv1/conv2/conv3 weights
    # p_ref   : (Cout, 4)         per-channel [b1+b3, b2, bn_scale, bn_shift]
    # o_ref   : (Cout, TILE_M)    lane-dense output tile
    cout = o_ref.shape[0]

    # Single fused MXU contraction for all three convs and all K taps.
    y = jax.lax.dot_general(
        w_ref[...], xcol_ref[...],
        dimension_numbers=(((1,), (0,)), ((), ())),
        preferred_element_type=jnp.float32)            # (3*Cout, TILE_M)

    s1 = y[0 * cout:1 * cout]                          # conv1 (no bias yet)
    s2 = y[1 * cout:2 * cout]                          # conv2
    s3 = y[2 * cout:3 * cout]                          # conv3

    p = p_ref[...].astype(jnp.float32)                 # (Cout, 4)
    b13, b2 = p[:, 0:1], p[:, 1:2]
    scale, shift = p[:, 2:3], p[:, 3:4]

    pre = s1 + s3 + b13 + jax.nn.sigmoid(s2 + b2)      # conv1 + sigmoid(conv2) + conv3
    out = jnp.maximum(pre, 0.0) * scale + shift        # relu -> folded eval-mode BN
    # TODO(synk): dropout omitted (identity in eval mode; training path needs RNG).
    o_ref[...] = out.astype(o_ref.dtype)


def tcn_forward(x_btnc, w_stack, b_stack, bn_scale, bn_shift, *, tile_m=8192):
    """TCNLayer.forward (eval): (B, T, N, Cin) -> (B, T-K+1, N, Cout)."""
    B, T, N, Cin = x_btnc.shape
    n_conv, K, _, Cout = w_stack.shape
    assert n_conv == 3
    Tout = T - K + 1
    R = B * N
    M = R * Tout
    itemsize = jnp.dtype(x_btnc.dtype).itemsize

    # ---- wrapper-side layout plumbing (channels-first, lane-dense M axis) ----
    # (B, T, N, Cin) -> (Cin, B, N, T) -> (Cin, R, T)
    x_crt = jnp.transpose(x_btnc, (3, 0, 2, 1)).reshape(Cin, R, T)
    # im2col over K time taps: Xcol[k*Cin + c, r*Tout + t] = x[c, r, t + k]
    taps = [x_crt[:, :, k:k + Tout] for k in range(K)]
    xcol = jnp.stack(taps, axis=0).reshape(K * Cin, M)

    # Stacked weights: Wc[ci*Cout + co, k*Cin + c] = w_stack[ci, k, c, co]
    w_c = jnp.transpose(w_stack, (0, 3, 1, 2)).reshape(3 * Cout, K * Cin)

    # Fold conv biases + eval-mode BN affine into one tiny per-channel block.
    params = jnp.stack(
        [b_stack[0] + b_stack[2], b_stack[1], bn_scale, bn_shift],
        axis=1).astype(jnp.float32)                    # (Cout, 4)

    # ---- tile / pad M so every grid step sees a full lane-dense tile ----
    lane = 128
    tile_m = max(lane, min(int(tile_m), _round_up(M, lane)))
    tile_m = _round_up(tile_m, lane)
    m_pad = _round_up(M, tile_m)
    if m_pad != M:
        xcol = jnp.pad(xcol, ((0, 0), (0, m_pad - M)))
    grid = (m_pad // tile_m,)

    cost = pl.CostEstimate(
        flops=int(2 * (3 * Cout) * (K * Cin) * m_pad + 8 * Cout * m_pad),
        transcendentals=int(Cout * m_pad),
        bytes_accessed=int(
            (K * Cin * m_pad + 3 * Cout * K * Cin + 4 * Cout + Cout * m_pad)
            * itemsize))

    out = pl.pallas_call(
        tcn_kernel,
        out_shape=jax.ShapeDtypeStruct((Cout, m_pad), x_btnc.dtype),
        grid=grid,
        in_specs=[
            pl.BlockSpec((K * Cin, tile_m), lambda i: (0, i)),
            pl.BlockSpec((3 * Cout, K * Cin), lambda i: (0, 0)),
            pl.BlockSpec((Cout, 4), lambda i: (0, 0)),
        ],
        out_specs=pl.BlockSpec((Cout, tile_m), lambda i: (0, i)),
        compiler_params=pltpu.CompilerParams(
            dimension_semantics=("parallel",)),
        cost_estimate=cost,
    )(xcol, w_c, params)

    # (Cout, M) -> (Cout, B, N, Tout) -> (B, Tout, N, Cout)
    out = out[:, :M].reshape(Cout, B, N, Tout)
    return jnp.transpose(out, (1, 3, 2, 0))


def ref_forward(x_btnc, w_stack, b_stack, scale, shift):
    """Pure-JAX reference of TCNLayer.forward (eval mode)."""
    B, T, N, Cin = x_btnc.shape
    _, K, _, Cout = w_stack.shape
    Tout = T - K + 1
    x = jnp.transpose(x_btnc, (0, 2, 1, 3))            # (B, N, T, Cin)

    def conv(ci):
        acc = b_stack[ci].reshape(1, 1, 1, Cout)
        for dt in range(K):
            acc = acc + jnp.einsum('bntc,cd->bntd',
                                   x[:, :, dt:dt + Tout, :], w_stack[ci, dt])
        return acc

    out = conv(0) + jax.nn.sigmoid(conv(1))
    out = jnp.maximum(out + conv(2), 0.0)
    out = out * scale.reshape(1, 1, 1, Cout) + shift.reshape(1, 1, 1, Cout)
    return jnp.transpose(out, (0, 2, 1, 3))            # (B, Tout, N, Cout)


if __name__ == "__main__":
    B, T, N = 2, 16, 64
    Cin, Cout, K = 4, 8, 3

    key = jax.random.PRNGKey(0)
    kx, kw, kb, kg, kbe, km, kv = jax.random.split(key, 7)

    # Quantize x / conv weights to bf16-representable values so the check is
    # insensitive to the MXU's f32-vs-bf16 pass precision mode.
    x = jax.random.normal(kx, (B, T, N, Cin), dtype=jnp.float32)
    x = x.astype(jnp.bfloat16).astype(jnp.float32)

    w_stack = 0.1 * jax.random.normal(kw, (3, K, Cin, Cout), dtype=jnp.float32)
    w_stack = w_stack.astype(jnp.bfloat16).astype(jnp.float32)
    b_stack = 0.1 * jax.random.normal(kb, (3, Cout), dtype=jnp.float32)

    # BatchNorm2d(out_features) eval-mode parameters, folded to scale/shift.
    eps = 1e-5
    gamma = 1.0 + 0.1 * jax.random.normal(kg, (Cout,), dtype=jnp.float32)
    beta = 0.1 * jax.random.normal(kbe, (Cout,), dtype=jnp.float32)
    running_mean = 0.1 * jax.random.normal(km, (Cout,), dtype=jnp.float32)
    running_var = 0.5 + jax.random.uniform(kv, (Cout,), dtype=jnp.float32)
    scale = gamma / jnp.sqrt(running_var + eps)
    shift = beta - running_mean * scale

    # tile_m=512 -> M = B*N*(T-K+1) = 1792 runs as a 4-step "parallel" grid
    # (last block zero-padded), exercising the pipelined/padded path even at
    # these small demo sizes.  Default tile_m=8192 is the production setting.
    out = tcn_forward(x, w_stack, b_stack, scale, shift, tile_m=512)
    out = jax.block_until_ready(out)

    expected = ref_forward(x, w_stack, b_stack, scale, shift)
    assert out.shape == (B, T - K + 1, N, Cout), out.shape
    assert jnp.allclose(out, expected, atol=1e-4, rtol=1e-4), (
        float(jnp.max(jnp.abs(out - expected))))

    print("KERNEL_OK")
</pallas_src>

<mosaic_0001>
module attributes {stable_mosaic.version = 11 : i64} {
  func.func @tcn_kernel(%arg0: i32, %arg1: memref<12x512xf32, #tpu.memory_space<vmem>>, %arg2: memref<24x12xf32, #tpu.memory_space<vmem>>, %arg3: memref<8x4xf32, #tpu.memory_space<vmem>>, %arg4: memref<8x512xf32, #tpu.memory_space<vmem>>) attributes {dimension_semantics = [#tpu.dimension_semantics<parallel>], iteration_bounds = array<i64: 4>, scalar_prefetch = 0 : i64, scratch_operands = 0 : i64, tpu.core_type = #tpu.core_type<tc>, window_params = [{transform_indices = @transform_0, window_bounds = array<i64: 12, 512>}, {pipeline_mode = #tpu.pipeline_mode<synchronous>, transform_indices = @transform_1, window_bounds = array<i64: 24, 12>}, {pipeline_mode = #tpu.pipeline_mode<synchronous>, transform_indices = @transform_2, window_bounds = array<i64: 8, 4>}, {transform_indices = @transform_3, window_bounds = array<i64: 8, 512>}]} {
    %c0 = arith.constant 0 : index
    %c0_0 = arith.constant 0 : index
    %0 = vector.load %arg2[%c0, %c0_0] : memref<24x12xf32, #tpu.memory_space<vmem>>, vector<24x12xf32>
    %c0_1 = arith.constant 0 : index
    %c0_2 = arith.constant 0 : index
    %1 = vector.load %arg1[%c0_1, %c0_2] : memref<12x512xf32, #tpu.memory_space<vmem>>, vector<12x512xf32>
    %cst = arith.constant dense<0.000000e+00> : vector<24x512xf32>
    %2 = tpu.matmul %0, %1, %cst {dimension_numbers = #tpu.dot_dimension_numbers<[1], [0], [0], [1], [0, 0, 1, 1], [], []>} : vector<24x12xf32>, vector<12x512xf32>, vector<24x512xf32> -> vector<24x512xf32>
    %3 = vector.extract_strided_slice %2 {offsets = [0, 0], sizes = [8, 512], strides = [1, 1]} : vector<24x512xf32> to vector<8x512xf32>
    %4 = vector.extract_strided_slice %2 {offsets = [8, 0], sizes = [8, 512], strides = [1, 1]} : vector<24x512xf32> to vector<8x512xf32>
    %5 = vector.extract_strided_slice %2 {offsets = [16, 0], sizes = [8, 512], strides = [1, 1]} : vector<24x512xf32> to vector<8x512xf32>
    %c0_3 = arith.constant 0 : index
    %c0_4 = arith.constant 0 : index
    %6 = vector.load %arg3[%c0_3, %c0_4] : memref<8x4xf32, #tpu.memory_space<vmem>>, vector<8x4xf32>
    %7 = vector.extract_strided_slice %6 {offsets = [0, 0], sizes = [8, 1], strides = [1, 1]} : vector<8x4xf32> to vector<8x1xf32>
    %8 = vector.extract_strided_slice %6 {offsets = [0, 1], sizes = [8, 1], strides = [1, 1]} : vector<8x4xf32> to vector<8x1xf32>
    %9 = vector.extract_strided_slice %6 {offsets = [0, 2], sizes = [8, 1], strides = [1, 1]} : vector<8x4xf32> to vector<8x1xf32>
    %10 = vector.extract_strided_slice %6 {offsets = [0, 3], sizes = [8, 1], strides = [1, 1]} : vector<8x4xf32> to vector<8x1xf32>
    %11 = arith.addf %3, %5 : vector<8x512xf32>
    %12 = vector.broadcast %7 : vector<8x1xf32> to vector<8x512xf32>
    %13 = arith.addf %11, %12 : vector<8x512xf32>
    %14 = vector.broadcast %8 : vector<8x1xf32> to vector<8x512xf32>
    %15 = arith.addf %4, %14 : vector<8x512xf32>
    %16 = arith.negf %15 : vector<8x512xf32>
    %17 = math.exp %16 : vector<8x512xf32>
    %cst_5 = arith.constant 1.000000e+00 : f32
    %18 = vector.broadcast %cst_5 : f32 to vector<8x512xf32>
    %19 = arith.addf %18, %17 : vector<8x512xf32>
    %20 = arith.divf %18, %19 : vector<8x512xf32>
    %21 = arith.addf %13, %20 : vector<8x512xf32>
    %cst_6 = arith.constant 0.000000e+00 : f32
    %22 = vector.broadcast %cst_6 : f32 to vector<8x512xf32>
    %23 = arith.maximumf %21, %22 : vector<8x512xf32>
    %24 = vector.broadcast %9 : vector<8x1xf32> to vector<8x512xf32>
    %25 = arith.mulf %23, %24 : vector<8x512xf32>
    %26 = vector.broadcast %10 : vector<8x1xf32> to vector<8x512xf32>
    %27 = arith.addf %25, %26 : vector<8x512xf32>
    %c0_7 = arith.constant 0 : index
    %c0_8 = arith.constant 0 : index
    %28 = vector.load %arg4[%c0_7, %c0_8] : memref<8x512xf32, #tpu.memory_space<vmem>>, vector<8x512xf32>
    tpu.vector_store %arg4[%c0_7, %c0_8], %27 {strides = array<i32>} : memref<8x512xf32, #tpu.memory_space<vmem>>, vector<8x512xf32>,
    return
  }
  func.func @transform_0(%arg0: i32) -> (i32, i32) {
    %c0_i32 = arith.constant 0 : i32
    %c0_i32_0 = arith.constant 0 : i32
    return %c0_i32, %arg0 : i32, i32
  }
  func.func @transform_1(%arg0: i32) -> (i32, i32) {
    %c0_i32 = arith.constant 0 : i32
    %c0_i32_0 = arith.constant 0 : i32
    %c0_i32_1 = arith.constant 0 : i32
    return %c0_i32, %c0_i32_0 : i32, i32
  }
  func.func @transform_2(%arg0: i32) -> (i32, i32) {
    %c0_i32 = arith.constant 0 : i32
    %c0_i32_0 = arith.constant 0 : i32
    %c0_i32_1 = arith.constant 0 : i32
    return %c0_i32, %c0_i32_0 : i32, i32
  }
  func.func @transform_3(%arg0: i32) -> (i32, i32) {
    %c0_i32 = arith.constant 0 : i32
    %c0_i32_0 = arith.constant 0 : i32
    return %c0_i32, %arg0 : i32, i32
  }
}

</mosaic_0001>

<llo_original>
// kernel: tpu_custom_call.1
$region0: #{tpu_custom_call.1}
  #allocation0 [shape = 'u32[]', space=smem, size = 0x4, offset = 0x4, fixed_abs, tag = 'smem constant byte address 0x4 - core index']
  #allocation1 [shape = 'u32[144,128]{1,0:T(1,128)}', space=vmem, size = 0x12000, scoped, tag = 'internal scratch']
  %s0 = inlined_call_operand.hbm [shape: f32[12,2048], index: 0, kind: input, shape index: {}]
  %s1 = inlined_call_operand.vmem [shape: f32[24,12], index: 1, kind: input, shape index: {}]
  %s2 = inlined_call_operand.vmem [shape: f32[8,4], index: 2, kind: input, shape index: {}]
  %s3 = inlined_call_operand.hbm [shape: f32[8,2048], index: 3, kind: output, shape index: {}]
  %s4 = sld [smem:[#allocation0]]
  $region49: #{tpu_custom_call.1} parent=0
    _
  %s6 = ssub.s32 1, %s4
  %s7 = scalar_select 0, %s6, %s4
  $region1: #{tpu_custom_call.1} parent=0
    #allocation2 [shape = 'u8[65536]{0}', space=vmem, size = 0x10000, scoped, tag = 'input window, operand 0']
    #allocation3 [shape = 's32[2]{0}', space=sflag, size = 0x8, scoped, tag = 'scoped memory for tpu_custom_call.1']
    #allocation4 [shape = 's32[2]{0}', space=sflag, size = 0x8, scoped, tag = 'scoped memory for tpu_custom_call.1']
    #allocation5 [shape = 'u8[32768]{0}', space=vmem, size = 0x8000, scoped, tag = 'output window, operand 0']
    %8 = vsyncpa [#allocation3], 0
    %s9 = scalar_lea.sflag [#allocation3], 1
    %10 = vsyncpa %s9, 0
    %11 = vsyncpa [#allocation4], 0
    %s12 = scalar_lea.sflag [#allocation4], 1
    %13 = vsyncpa %s12, 0
    loop: start=0, step=1, limit=6
    $region2: #{tpu_custom_call.1} parent=1 // loop_pre_header
      _
    $region3: #{tpu_custom_call.1} parent=1 // loop_header
      %s15 = sphi 0, %s19
      %p16 = scmp.ge.s32.totalorder %s15, 6
      %s25 = sphi 0, %s27
      %s28 = sphi 0, %s25
      %s29 = sphi 0, %s28
      %s45 = sphi 0, %s29
      %s49 = sphi 0, %s49
      %s51 = sphi 0, %s49
      %s52 = sphi 0, %s51
      %s66 = sphi 0, %s52
      %s70 = sphi 0, %s70
      %s72 = sphi 0, %s70
      %s73 = sphi 0, %s72
      %s87 = sphi 0, %s73
      %s93 = sphi 0, %s95
      %s96 = sphi 0, %s93
      %s97 = sphi 0, %s96
      %s113 = sphi 0, %s97
    $region4: #{tpu_custom_call.1} parent=1 // loop_header_branch
      %18 = sbr.rel (%p16) target = $region8
    $region5: #{tpu_custom_call.1} parent=1 // loop_body
      %s20 = ssub.s32 %s15, 1
      %s21 = ssub.s32 %s15, 2
      %s22 = sadd.s32 %s15, 1
      %s23 = ssub.s32 %s15, %s22
      %p24 = scmp.eq.s32.totalorder %s23, 0
      %s26 = sadd.s32 %s25, 1
      %s27 = scalar_select %p24, %s25, %s26
      %p30 = pneg %p24
      %p31 = scmp.eq.s32.totalorder %s15, 3
      %p32 = por %p30, %p31
      %p33 = scmp.ne.s32.totalorder %s25, %s28
      %p34 = scmp.eq.s32.totalorder %s15, 0
      %p35 = por %p33, %p34
      %p36 = scmp.ne.s32.totalorder %s25, %s28
      %p37 = scmp.eq.s32.totalorder %s20, 3
      %p38 = por %p36, %p37
      %p39 = scmp.ne.s32.totalorder %s28, %s29
      %p40 = scmp.eq.s32.totalorder %s20, 0
      %p41 = por %p39, %p40
      %p42 = scmp.ne.s32.totalorder %s28, %s29
      %p43 = scmp.eq.s32.totalorder %s21, 3
      %p44 = por %p42, %p43
      %p46 = scmp.ne.s32.totalorder %s29, %s45
      %p47 = scmp.eq.s32.totalorder %s21, 0
      %p48 = por %p46, %p47
      %s50 = sadd.s32 %s49, 1
      %p53 = scmp.eq.s32.totalorder %s15, 3
      %p54 = scmp.ne.s32.totalorder %s49, %s51
      %p55 = scmp.eq.s32.totalorder %s15, 0
      %p56 = por %p54, %p55
      %p57 = scmp.ne.s32.totalorder %s49, %s51
      %p58 = scmp.eq.s32.totalorder %s20, 3
      %p59 = por %p57, %p58
      %p60 = scmp.ne.s32.totalorder %s51, %s52
      %p61 = scmp.eq.s32.totalorder %s20, 0
      %p62 = por %p60, %p61
      %p63 = scmp.ne.s32.totalorder %s51, %s52
      %p64 = scmp.eq.s32.totalorder %s21, 3
      %p65 = por %p63, %p64
      %p67 = scmp.ne.s32.totalorder %s52, %s66
      %p68 = scmp.eq.s32.totalorder %s21, 0
      %p69 = por %p67, %p68
      %s71 = sadd.s32 %s70, 1
      %p74 = scmp.eq.s32.totalorder %s15, 3
      %p75 = scmp.ne.s32.totalorder %s70, %s72
      %p76 = scmp.eq.s32.totalorder %s15, 0
      %p77 = por %p75, %p76
      %p78 = scmp.ne.s32.totalorder %s70, %s72
      %p79 = scmp.eq.s32.totalorder %s20, 3
      %p80 = por %p78, %p79
      %p81 = scmp.ne.s32.totalorder %s72, %s73
      %p82 = scmp.eq.s32.totalorder %s20, 0
      %p83 = por %p81, %p82
      %p84 = scmp.ne.s32.totalorder %s72, %s73
      %p85 = scmp.eq.s32.totalorder %s21, 3
      %p86 = por %p84, %p85
      %p88 = scmp.ne.s32.totalorder %s73, %s87
      %p89 = scmp.eq.s32.totalorder %s21, 0
      %p90 = por %p88, %p89
      %s91 = ssub.s32 %s15, %s22
      %p92 = scmp.eq.s32.totalorder %s91, 0
      %s94 = sadd.s32 %s93, 1
      %s95 = scalar_select %p92, %s93, %s94
      %p98 = pneg %p92
      %p99 = scmp.eq.s32.totalorder %s15, 3
      %p100 = por %p98, %p99
      %p101 = scmp.ne.s32.totalorder %s93, %s96
      %p102 = scmp.eq.s32.totalorder %s15, 0
      %p103 = por %p101, %p102
      %p104 = scmp.ne.s32.totalorder %s93, %s96
      %p105 = scmp.eq.s32.totalorder %s20, 3
      %p106 = por %p104, %p105
      %p107 = scmp.ne.s32.totalorder %s96, %s97
      %p108 = scmp.eq.s32.totalorder %s20, 0
      %p109 = por %p107, %p108
      %p110 = scmp.ne.s32.totalorder %s96, %s97
      %p111 = scmp.eq.s32.totalorder %s21, 3
      %p112 = por %p110, %p111
      %p114 = scmp.ne.s32.totalorder %s97, %s113
      %p115 = scmp.eq.s32.totalorder %s21, 0
      %p116 = por %p114, %p115
      %p117 = scmp.le.s32.totalorder 1, %s15
      %p118 = scmp.lt.s32.totalorder %s15, 5
      %p119 = pnand %p117, %p118
      %p120 = pneg %p119
      // Predicated region
      $region9: #{tpu_custom_call.1} parent=5 // pred_check
        _
      $region10: #{tpu_custom_call.1} parent=5 // pred_check_branch
        %122 = sbr.rel (%p119) target = $region12
      $region11: #{tpu_custom_call.1} parent=5 // pred_region
        %s123 = ssub.s32 %s15, 1
        // Predicated region
        $region13: #{tpu_custom_call.1} parent=11 // pred_check
          %p124 = pneg %p62
        $region14: #{tpu_custom_call.1} parent=11 // pred_check_branch
          %126 = sbr.rel (%p124) target = $region16
        $region15: #{tpu_custom_call.1} parent=11 // pred_region
          _
        $region16: #{tpu_custom_call.1} parent=11 // pred_fallthru
          _
        // Predicated region
        $region17: #{tpu_custom_call.1} parent=11 // pred_check
          %p127 = pneg %p83
        $region18: #{tpu_custom_call.1} parent=11 // pred_check_branch
          %129 = sbr.rel (%p127) target = $region20
        $region19: #{tpu_custom_call.1} parent=11 // pred_region
          _
        $region20: #{tpu_custom_call.1} parent=11 // pred_fallthru
          _
      $region12: #{tpu_custom_call.1} parent=5 // pred_fallthru
        _
      %p130 = scmp.lt.s32.totalorder %s15, 4
      // Predicated region
      $region21: #{tpu_custom_call.1} parent=5 // pred_check
        %p131 = pneg %p130
      $region22: #{tpu_custom_call.1} parent=5 // pred_check_branch
        %133 = sbr.rel (%p131) target = $region24
      $region23: #{tpu_custom_call.1} parent=5 // pred_region
        // Predicated region
        $region25: #{tpu_custom_call.1} parent=23 // pred_check
          %p134 = pneg %p35
        $region26: #{tpu_custom_call.1} parent=23 // pred_check_branch
          %136 = sbr.rel (%p134) target = $region28
        $region27: #{tpu_custom_call.1} parent=23 // pred_region
          %s137 = sand.u32 %s25, 1
          %s138 = scalar_lea.sflag [#allocation3], %s137
          %s139 = sand.u32 %s25, 1
          %s140 = smul.addr %s139, 64
          %s141 = scalar_lea.vmem [#allocation2], %s140
          %s142 = smul.u32 4, %s15
          %s144 = ssub.s32 1024, 1024
          %145 = vsyncadd %s138, %s144
          %s146 = smul.addr %s142, 128
          %s147 = scalar_lea.hbm %s0, %s146
          %s148 = sshll.u32 %s141, 4
          %s149 = int_to_ptr.vmem [resolvable:$true] %s148
          %154 = dma.hbm_to_vmem [thread:$0]  %s147, 1024, %s149, %s138, 2048, 512, 32
        $region28: #{tpu_custom_call.1} parent=23 // pred_fallthru
          _
      $region24: #{tpu_custom_call.1} parent=5 // pred_fallthru
        _
      %p155 = scmp.le.s32.totalorder 1, %s15
      %p156 = scmp.lt.s32.totalorder %s15, 5
      %p157 = pnand %p155, %p156
      %p158 = pneg %p157
      // Predicated region
      $region29: #{tpu_custom_call.1} parent=5 // pred_check
        _
      $region30: #{tpu_custom_call.1} parent=5 // pred_check_branch
        %160 = sbr.rel (%p157) target = $region32
      $region31: #{tpu_custom_call.1} parent=5 // pred_region
        %s161 = ssub.s32 %s15, 1
        %s162 = sand.u32 %s28, 1
        %s163 = scalar_lea.sflag [#allocation3], %s162
        %s164 = sand.u32 %s28, 1
        %s165 = smul.addr %s164, 64
        %s166 = scalar_lea.vmem [#allocation2], %s165
        // Predicated region
        $region33: #{tpu_custom_call.1} parent=31 // pred_check
          %p167 = pneg %p41
        $region34: #{tpu_custom_call.1} parent=31 // pred_check_branch
          %169 = sbr.rel (%p167) target = $region36
        $region35: #{tpu_custom_call.1} parent=31 // pred_region
          %170 = dma.done %s163, 1024
        $region36: #{tpu_custom_call.1} parent=31 // pred_fallthru
          _
        %s171 = sand.u32 %s28, 1
        %s172 = scalar_lea.sflag [#allocation3], %s171
        %s173 = sand.u32 %s28, 1
        %s174 = smul.addr %s173, 64
        %s175 = scalar_lea.vmem [#allocation2], %s174
        %p176 = pneg %p41
        %p177 = pneg %p38
        %p178 = pneg %p62
        %p179 = pneg %p59
        %p180 = pneg %p83
        %p181 = pneg %p80
        %p182 = pneg %p109
        %p183 = pneg %p106
        %s184 = sand.u32 %s96, 1
        %s185 = scalar_lea.sflag [#allocation4], %s184
        %s186 = sand.u32 %s96, 1
        %s187 = smul.addr %s186, 32
        %s188 = scalar_lea.vmem [#allocation5], %s187
        %s189 = smul.u32 4, %s20
        %s190 = smul.u32 4, %s20
        %v191 = vld [vmem:[%s1] sm:$0xff]
        %v192 = vld [vmem:[%s1 + $0x8] sm:$0xff]
        %v193 = vld [vmem:[%s1 + $0x10] sm:$0xff]
        %v194 = vld [vmem:[%s166] sm:$0xff]
        %v195 = vld [vmem:[%s166 + $0x8] sm:$0xff]
        %v196 = vld [vmem:[%s166 + $0x10] sm:$0xff]
        %v197 = vld [vmem:[%s166 + $0x18] sm:$0xff]
        %v198 = vld [vmem:[%s166 + $0x20] sm:$0xf]
        %v199 = vld [vmem:[%s166 + $0x28] sm:$0xf]
        %v200 = vld [vmem:[%s166 + $0x30] sm:$0xf]
        %v201 = vld [vmem:[%s166 + $0x38] sm:$0xf]
        %vm202 = vcmask 97280
        %v204 = vsel %vm202, %v191, 0
        %v207 = vsel %vm202, %v192, 0
        %v210 = vsel %vm202, %v193, 0
        %vm212 = vcmask 1043456
        %v214 = vsel %vm212, %v198, 0
        %v217 = vsel %vm212, %v199, 0
        %v220 = vsel %vm212, %v200, 0
        %v223 = vsel %vm212, %v201, 0
        %225 = vmatprep.subr.mxu0 %v195
        %226 = vmatpush1.msra.mxu0 %v194
        %227 = vmatprep.subr.mxu0 %v217
        %228 = vmatpush1.msra.mxu0 %v214
        %229 = vmatprep.subr.mxu0 0.0
        %230 = vmatpush1.msra.mxu0 0.0
        %231 = vmatprep.subr.mxu0 0.0
        %232 = vmatpush1.msra.mxu0 0.0
        %233 = vmatprep.subr.mxu0 0.0
        %234 = vmatpush1.msra.mxu0 0.0
        %235 = vmatprep.subr.mxu0 0.0
        %236 = vmatpush1.msra.mxu0 0.0
        %237 = vmatprep.subr.mxu0 0.0
        %238 = vmatpush1.msra.mxu0 0.0
        %239 = vmatprep.subr.mxu0 0.0
        %240 = vmatpush1.msra.mxu0 0.0
        %241 = vmatprep.subr.mxu0 0.0
        %242 = vmatpush1.msra.mxu0 0.0
        %243 = vmatprep.subr.mxu0 0.0
        %244 = vmatpush1.msra.mxu0 0.0
        %245 = vmatprep.subr.mxu0 0.0
        %246 = vmatpush1.msra.mxu0 0.0
        %247 = vmatprep.subr.mxu0 0.0
        %248 = vmatpush1.msra.mxu0 0.0
        %249 = vmatprep.subr.mxu0 0.0
        %250 = vmatpush1.msra.mxu0 0.0
        %251 = vmatprep.subr.mxu0 0.0
        %252 = vmatpush1.msra.mxu0 0.0
        %253 = vmatprep.subr.mxu0 0.0
        %254 = vmatpush1.msra.mxu0 0.0
        %255 = vmatprep.subr.mxu0 0.0
        %256 = vmatpush1.msra.mxu0 0.0
        %257 = vmatprep.subr.mxu0 0.0
        %258 = vmatpush1.msra.mxu0 0.0
        %259 = vmatprep.subr.mxu0 0.0
        %260 = vmatpush1.msra.mxu0 0.0
        %261 = vmatprep.subr.mxu0 0.0
        %262 = vmatpush1.msra.mxu0 0.0
        %263 = vmatprep.subr.mxu0 0.0
        %264 = vmatpush1.msra.mxu0 0.0
        %265 = vmatprep.subr.mxu0 0.0
        %266 = vmatpush1.msra.mxu0 0.0
        %267 = vmatprep.subr.mxu0 0.0
        %268 = vmatpush1.msra.mxu0 0.0
        %269 = vmatprep.subr.mxu0 0.0
        %270 = vmatpush1.msra.mxu0 0.0
        %271 = vmatprep.subr.mxu0 0.0
        %272 = vmatpush1.msra.mxu0 0.0
        %273 = vmatprep.subr.mxu0 0.0
        %274 = vmatpush1.msra.mxu0 0.0
        %275 = vmatprep.subr.mxu0 0.0
        %276 = vmatpush1.msra.mxu0 0.0
        %277 = vmatprep.subr.mxu0 0.0
        %278 = vmatpush1.msra.mxu0 0.0
        %279 = vmatprep.subr.mxu0 0.0
        %280 = vmatpush1.msra.mxu0 0.0
        %281 = vmatprep.subr.mxu0 0.0
        %282 = vmatpush1.msra.mxu0 0.0
        %283 = vmatprep.subr.mxu0 0.0
        %284 = vmatpush1.msra.mxu0 0.0
        %285 = vmatprep.subr.mxu0 0.0
        %286 = vmatpush1.msra.mxu0 0.0
        %287 = vmatprep.subr.mxu0 0.0
        %288 = vmatpush1.msra.mxu0 0.0
        %289 = vmatprep.mubr.f32.mxu0 0.0
        %290 = vmatmul.mubr.f32.gmra.mrb[0].mxu0 %v204
        %v291 = vpop.f32.mrb[0].mxu0
        %v292 = vadd.f32 0.0, %v291
        %v293 = vpop.f32.mrb[0].mxu0
        %v294 = vadd.f32 0.0, %v293
        %295 = vmatprep.mubr.f32.mxu0 0.0
        %296 = vmatmul.mubr.f32.gmra.mrb[0].mxu0 %v207
        %v297 = vpop.f32.mrb[0].mxu0
        %v298 = vadd.f32 0.0, %v297
        %v299 = vpop.f32.mrb[0].mxu0
        %v300 = vadd.f32 0.0, %v299
        %301 = vmatprep.mubr.f32.mxu0 0.0
        %302 = vmatmul.mubr.f32.gmra.mrb[0].mxu0 %v210
        %v303 = vpop.f32.mrb[0].mxu0
        %v304 = vadd.f32 0.0, %v303
        %v305 = vpop.f32.mrb[0].mxu0
        %v306 = vadd.f32 0.0, %v305
        %307 = vdwg.mxu0
        %308 = vmatprep.subr.mxu0 %v197
        %309 = vmatpush1.msra.mxu0 %v196
        %310 = vmatprep.subr.mxu0 %v223
        %311 = vmatpush1.msra.mxu0 %v220
        %312 = vmatprep.subr.mxu0 0.0
        %313 = vmatpush1.msra.mxu0 0.0
        %314 = vmatprep.subr.mxu0 0.0
        %315 = vmatpush1.msra.mxu0 0.0
        %316 = vmatprep.subr.mxu0 0.0
        %317 = vmatpush1.msra.mxu0 0.0
        %318 = vmatprep.subr.mxu0 0.0
        %319 = vmatpush1.msra.mxu0 0.0
        %320 = vmatprep.subr.mxu0 0.0
        %321 = vmatpush1.msra.mxu0 0.0
        %322 = vmatprep.subr.mxu0 0.0
        %323 = vmatpush1.msra.mxu0 0.0
        %324 = vmatprep.subr.mxu0 0.0
        %325 = vmatpush1.msra.mxu0 0.0
        %326 = vmatprep.subr.mxu0 0.0
        %327 = vmatpush1.msra.mxu0 0.0
        %328 = vmatprep.subr.mxu0 0.0
        %329 = vmatpush1.msra.mxu0 0.0
        %330 = vmatprep.subr.mxu0 0.0
        %331 = vmatpush1.msra.mxu0 0.0
        %332 = vmatprep.subr.mxu0 0.0
        %333 = vmatpush1.msra.mxu0 0.0
        %334 = vmatprep.subr.mxu0 0.0
        %335 = vmatpush1.msra.mxu0 0.0
        %336 = vmatprep.subr.mxu0 0.0
        %337 = vmatpush1.msra.mxu0 0.0
        %338 = vmatprep.subr.mxu0 0.0
        %339 = vmatpush1.msra.mxu0 0.0
        %340 = vmatprep.subr.mxu0 0.0
        %341 = vmatpush1.msra.mxu0 0.0
        %342 = vmatprep.subr.mxu0 0.0
        %343 = vmatpush1.msra.mxu0 0.0
        %344 = vmatprep.subr.mxu0 0.0
        %345 = vmatpush1.msra.mxu0 0.0
        %346 = vmatprep.subr.mxu0 0.0
        %347 = vmatpush1.msra.mxu0 0.0
        %348 = vmatprep.subr.mxu0 0.0
        %349 = vmatpush1.msra.mxu0 0.0
        %350 = vmatprep.subr.mxu0 0.0
        %351 = vmatpush1.msra.mxu0 0.0
        %352 = vmatprep.subr.mxu0 0.0
        %353 = vmatpush1.msra.mxu0 0.0
        %354 = vmatprep.subr.mxu0 0.0
        %355 = vmatpush1.msra.mxu0 0.0
        %356 = vmatprep.subr.mxu0 0.0
        %357 = vmatpush1.msra.mxu0 0.0
        %358 = vmatprep.subr.mxu0 0.0
        %359 = vmatpush1.msra.mxu0 0.0
        %360 = vmatprep.subr.mxu0 0.0
        %361 = vmatpush1.msra.mxu0 0.0
        %362 = vmatprep.subr.mxu0 0.0
        %363 = vmatpush1.msra.mxu0 0.0
        %364 = vmatprep.subr.mxu0 0.0
        %365 = vmatpush1.msra.mxu0 0.0
        %366 = vmatprep.subr.mxu0 0.0
        %367 = vmatpush1.msra.mxu0 0.0
        %368 = vmatprep.subr.mxu0 0.0
        %369 = vmatpush1.msra.mxu0 0.0
        %370 = vmatprep.subr.mxu0 0.0
        %371 = vmatpush1.msra.mxu0 0.0
        %372 = vmatprep.mubr.f32.mxu0 0.0
        %373 = vmatmul.mubr.f32.gmra.mrb[0].mxu0 %v204
        %v374 = vpop.f32.mrb[0].mxu0
        %v375 = vadd.f32 0.0, %v374
        %v376 = vpop.f32.mrb[0].mxu0
        %v377 = vadd.f32 0.0, %v376
        %378 = vmatprep.mubr.f32.mxu0 0.0
        %379 = vmatmul.mubr.f32.gmra.mrb[0].mxu0 %v207
        %v380 = vpop.f32.mrb[0].mxu0
        %v381 = vadd.f32 0.0, %v380
        %v382 = vpop.f32.mrb[0].mxu0
        %v383 = vadd.f32 0.0, %v382
        %384 = vmatprep.mubr.f32.mxu0 0.0
        %385 = vmatmul.mubr.f32.gmra.mrb[0].mxu0 %v210
        %v386 = vpop.f32.mrb[0].mxu0
        %v387 = vadd.f32 0.0, %v386
        %v388 = vpop.f32.mrb[0].mxu0
        %v389 = vadd.f32 0.0, %v388
        %390 = vdwg.mxu0
        %v391 = vld [vmem:[%s2] sm:$0xff]
        %v392 = vadd.f32 %v292, %v304
        %v393 = vadd.f32 %v294, %v306
        %v394 = vadd.f32 %v375, %v387
        %v395 = vadd.f32 %v377, %v389
        %397 = vset.pattern.permute.xlu0 0
        %398 = vperm.xlu0 %397, %v391
        %v399 = vpop.permute.xlu0 %398
        %v401 = vadd.f32 %v392, %v399
        %v402 = vadd.f32 %v393, %v399
        %v403 = vadd.f32 %v394, %v399
        %v404 = vadd.f32 %v395, %v399
        %405 = vset.pattern.permute.xlu0 1
        %406 = vperm.xlu0 %405, %v391
        %v407 = vpop.permute.xlu0 %406
        %v409 = vadd.f32 %v298, %v407
        %v410 = vadd.f32 %v300, %v407
        %v411 = vadd.f32 %v381, %v407
        %v412 = vadd.f32 %v383, %v407
        %v413 = vxor.u32 %v409, 2147483648
        %v414 = vxor.u32 %v410, 2147483648
        %v415 = vxor.u32 %v411, 2147483648
        %v416 = vxor.u32 %v412, 2147483648
        %v417 = vmul.f32 %v413, 1.442695
        %v418 = vpow.pop %v417
        %v419 = vmul.f32 %v414, 1.442695
        %v420 = vpow.pop %v419
        %v421 = vmul.f32 %v415, 1.442695
        %v422 = vpow.pop %v421
        %v423 = vmul.f32 %v416, 1.442695
        %v424 = vpow.pop %v423
        %v425 = vadd.f32 %v418, 1.0
        %v426 = vadd.f32 %v420, 1.0
        %v427 = vadd.f32 %v422, 1.0
        %v428 = vadd.f32 %v424, 1.0
        %v429 = vrcp.pop %v425
        %v430 = vmul.f32 1.0, %v429
        %v431 = vrcp.pop %v426
        %v432 = vmul.f32 1.0, %v431
        %v433 = vrcp.pop %v427
        %v434 = vmul.f32 1.0, %v433
        %v435 = vrcp.pop %v428
        %v436 = vmul.f32 1.0, %v435
        %v437 = vadd.f32 %v401, %v430
        %v438 = vadd.f32 %v402, %v432
        %v439 = vadd.f32 %v403, %v434
        %v440 = vadd.f32 %v404, %v436
        %v441 = vmax.f32 %v437, 0.0
        %v442 = vmax.f32 %v438, 0.0
        %v443 = vmax.f32 %v439, 0.0
        %v444 = vmax.f32 %v440, 0.0
        %445 = vset.pattern.permute.xlu0 2
        %446 = vperm.xlu0 %445, %v391
        %v447 = vpop.permute.xlu0 %446
        %v449 = vmul.f32 %v441, %v447
        %v450 = vmul.f32 %v442, %v447
        %v451 = vmul.f32 %v443, %v447
        %v452 = vmul.f32 %v444, %v447
        %453 = vset.pattern.permute.xlu0 3
        %454 = vperm.xlu0 %453, %v391
        %v455 = vpop.permute.xlu0 %454
        %v457 = vadd.f32 %v449, %v455
        %v458 = vadd.f32 %v450, %v455
        %v459 = vadd.f32 %v451, %v455
        %v460 = vadd.f32 %v452, %v455
        %461 = vst [vmem:[%s188] sm:$0xff] %v457
        %462 = vst [vmem:[%s188 + $0x8] sm:$0xff] %v458
        %463 = vst [vmem:[%s188 + $0x10] sm:$0xff] %v459
        %464 = vst [vmem:[%s188 + $0x18] sm:$0xff] %v460
        %s465 = sand.u32 %s96, 1
        %s466 = scalar_lea.sflag [#allocation4], %s465
        %s467 = sand.u32 %s96, 1
        %s468 = smul.addr %s467, 32
        %s469 = scalar_lea.vmem [#allocation5], %s468
        // Predicated region
        $region37: #{tpu_custom_call.1} parent=31 // pred_check
          %p470 = pneg %p106
        $region38: #{tpu_custom_call.1} parent=31 // pred_check_branch
          %472 = sbr.rel (%p470) target = $region40
        $region39: #{tpu_custom_call.1} parent=31 // pred_region
          %s473 = smul.u32 4, %s20
          %s475 = ssub.s32 512, 512
          %476 = vsyncadd %s466, %s475
          %s477 = smul.addr %s473, 128
          %s478 = scalar_lea.hbm %s3, %s477
          %s480 = sshll.u32 %s469, 4
          %s481 = int_to_ptr.vmem [resolvable:$true] %s480
          %483 = dma.vmem_to_hbm [thread:$0]  %s481, 512, %s478, %s466
        $region40: #{tpu_custom_call.1} parent=31 // pred_fallthru
          _
      $region32: #{tpu_custom_call.1} parent=5 // pred_fallthru
        _
      %p484 = scmp.le.s32.totalorder 2, %s15
      // Predicated region
      $region41: #{tpu_custom_call.1} parent=5 // pred_check
        %p485 = pneg %p484
      $region42: #{tpu_custom_call.1} parent=5 // pred_check_branch
        %487 = sbr.rel (%p485) target = $region44
      $region43: #{tpu_custom_call.1} parent=5 // pred_region
        %s488 = ssub.s32 %s15, 2
        // Predicated region
        $region45: #{tpu_custom_call.1} parent=43 // pred_check
          %p489 = pneg %p112
        $region46: #{tpu_custom_call.1} parent=43 // pred_check_branch
          %491 = sbr.rel (%p489) target = $region48
        $region47: #{tpu_custom_call.1} parent=43 // pred_region
          %s492 = sand.u32 %s97, 1
          %s493 = scalar_lea.sflag [#allocation4], %s492
          %s494 = sand.u32 %s97, 1
          %s495 = smul.addr %s494, 32
          %s496 = scalar_lea.vmem [#allocation5], %s495
          %497 = dma.done %s493, 512
        $region48: #{tpu_custom_call.1} parent=43 // pred_fallthru
          _
      $region44: #{tpu_custom_call.1} parent=5 // pred_fallthru
        _
    $region6: #{tpu_custom_call.1} parent=1 // loop_footer
      %s19 = sadd.s32 1, %s15
    $region7: #{tpu_custom_call.1} parent=1 // loop_footer_branch
      %14 = sbr.rel target = $region3
    $region8: #{tpu_custom_call.1} parent=1 // loop_exit
      _
    %498 = vsyncpa [#allocation3], 1
    %s499 = scalar_lea.sflag [#allocation3], 1
    %500 = vsyncpa %s499, 1
    %501 = vsyncpa [#allocation4], 1
    %s502 = scalar_lea.sflag [#allocation4], 1
    %503 = vsyncpa %s502, 1

</llo_original>
